<compile_context>
chip_gen: v7x
topology: tpu7x:2x2x1
jax: 0.10.0
libtpu: 0.0.40
codegen_flags: <defaults>
</compile_context>

<pallas_src>
import functools

import jax
import jax.numpy as jnp
from jax.experimental import pallas as pl
from jax.experimental.pallas import tpu as pltpu

_LANE = 1024  # 8 * 128: lane-dense, always satisfies the (8, 128) constraint.
_MAX_BLOCK_BYTES = 8 * 1024 * 1024  # ~8 MiB blocks: per-step overhead < ~6%.


def _identity_kernel(x_ref, o_ref):
    # Pure pass-through of the current VMEM tile.
    o_ref[...] = x_ref[...]


def _round_up(n, m):
    return ((n + m - 1) // m) * m


def _plan(total, itemsize):
    """Pick (rows_padded, block_rows, grid) for a lane-dense streaming copy."""
    rows = _round_up(total, _LANE) // _LANE          # rows of width _LANE
    bytes_per_row = _LANE * itemsize
    max_rows = max(8, (_MAX_BLOCK_BYTES // bytes_per_row) // 8 * 8)

    if rows >= 16:
        # At least two grid steps (v7x megacore), block_rows a multiple of 8,
        # capped at ~8 MiB.
        block_rows = min(max_rows, _round_up((rows + 1) // 2, 8))
    else:
        # Tiny slab: a single block equal to the full array dims is legal and
        # trivially fits VMEM (< 64 KiB).
        block_rows = rows

    rows_padded = _round_up(rows, block_rows)
    grid = rows_padded // block_rows
    return rows_padded, block_rows, grid


@functools.partial(jax.jit, static_argnames=())
def cnn_forward(x):
    """Pallas implementation of CNN.forward (identity, see header note).

    x: f32[N, C, H, W]  (NCHW, matching the PyTorch convention)
    returns: f32[N, C, H, W]
    """
    orig_shape = x.shape
    total = x.size
    itemsize = x.dtype.itemsize

    rows_padded, block_rows, grid_steps = _plan(total, itemsize)
    padded_total = rows_padded * _LANE

    flat = x.reshape(-1)
    if padded_total != total:
        flat = jnp.pad(flat, (0, padded_total - total))
    x2d = flat.reshape(rows_padded, _LANE)

    out2d = pl.pallas_call(
        _identity_kernel,
        out_shape=jax.ShapeDtypeStruct((rows_padded, _LANE), x.dtype),
        grid=(grid_steps,),
        in_specs=[pl.BlockSpec((block_rows, _LANE), lambda i: (i, 0))],
        out_specs=pl.BlockSpec((block_rows, _LANE), lambda i: (i, 0)),
        cost_estimate=pl.CostEstimate(
            flops=0,
            transcendentals=0,
            bytes_accessed=2 * total * itemsize,
        ),
        compiler_params=pltpu.CompilerParams(
            dimension_semantics=("parallel",),
            # 2 (in) + 2 (out) double-buffers x <= 8 MiB blocks <= 32 MiB;
            # 40 MiB leaves headroom and stays under v7x's 64 MiB physical.
            vmem_limit_bytes=40 * 1024 * 1024,
        ),
    )(x2d)

    return out2d.reshape(-1)[:total].reshape(orig_shape)


if __name__ == "__main__":
    key = jax.random.PRNGKey(0)
    # Small shapes consistent with a vision-style NCHW input.
    x = jax.random.normal(key, (2, 4, 16, 16), dtype=jnp.float32)

    y = cnn_forward(x)
    jax.block_until_ready(y)

    # Sanity check: identity semantics.
    assert y.shape == x.shape
    assert jnp.allclose(y, x)

    print("KERNEL_OK")
</pallas_src>

<mosaic_0001>
module attributes {stable_mosaic.version = 11 : i64} {
  func.func @_identity_kernel(%arg0: i32, %arg1: memref<2x1024xf32, #tpu.memory_space<vmem>>, %arg2: memref<2x1024xf32, #tpu.memory_space<vmem>>) attributes {dimension_semantics = [#tpu.dimension_semantics<parallel>], iteration_bounds = array<i64: 1>, scalar_prefetch = 0 : i64, scratch_operands = 0 : i64, tpu.core_type = #tpu.core_type<tc>, window_params = [{transform_indices = @transform_0, window_bounds = array<i64: 2, 1024>}, {transform_indices = @transform_1, window_bounds = array<i64: 2, 1024>}]} {
    %c0 = arith.constant 0 : index
    %c0_0 = arith.constant 0 : index
    %0 = vector.load %arg1[%c0, %c0_0] : memref<2x1024xf32, #tpu.memory_space<vmem>>, vector<2x1024xf32>
    %c0_1 = arith.constant 0 : index
    %c0_2 = arith.constant 0 : index
    %1 = vector.load %arg2[%c0_1, %c0_2] : memref<2x1024xf32, #tpu.memory_space<vmem>>, vector<2x1024xf32>
    tpu.vector_store %arg2[%c0_1, %c0_2], %0 {strides = array<i32>} : memref<2x1024xf32, #tpu.memory_space<vmem>>, vector<2x1024xf32>,
    return
  }
  func.func @transform_0(%arg0: i32) -> (i32, i32) {
    %c0_i32 = arith.constant 0 : i32
    %c0_i32_0 = arith.constant 0 : i32
    return %arg0, %c0_i32 : i32, i32
  }
  func.func @transform_1(%arg0: i32) -> (i32, i32) {
    %c0_i32 = arith.constant 0 : i32
    %c0_i32_0 = arith.constant 0 : i32
    return %arg0, %c0_i32 : i32, i32
  }
}

</mosaic_0001>

<llo_original>
// kernel: cnn_forward.1
$region0: #{cnn_forward.1}
  #allocation0 [shape = 'u32[]', space=smem, size = 0x4, offset = 0x4, fixed_abs, tag = 'smem constant byte address 0x4 - core index']
  #allocation1 [shape = 'u32[144,128]{1,0:T(1,128)}', space=vmem, size = 0x12000, scoped, tag = 'internal scratch']
  %s0 = inlined_call_operand.vmem [shape: f32[2,1024], index: 0, kind: input, shape index: {}]
  %s1 = inlined_call_operand.vmem [shape: f32[2,1024], index: 1, kind: output, shape index: {}]
  %s2 = sld [smem:[#allocation0]]
  $region14: #{cnn_forward.1} parent=0
    _
  %s4 = ssub.s32 1, %s2
  %s5 = scalar_select 0, %s4, %s2
  // Predicated region
  $region2: #{cnn_forward.1} parent=0 // pred_check
    _
  $region3: #{cnn_forward.1} parent=0 // pred_check_branch
    %7 = sbr.rel (0) target = $region5
  $region4: #{cnn_forward.1} parent=0 // pred_region
    _
  $region5: #{cnn_forward.1} parent=0 // pred_fallthru
    _
  %v8 = vld [vmem:[%s0] sm:$0xff]
  %v9 = vld [vmem:[%s0 + $0x8] sm:$0xff]
  %10 = vst [vmem:[%s1] sm:$0xff] %v8
  %11 = vst [vmem:[%s1 + $0x8] sm:$0xff] %v9
  // Predicated region
  $region6: #{cnn_forward.1} parent=0 // pred_check
    _
  $region7: #{cnn_forward.1} parent=0 // pred_check_branch
    %13 = sbr.rel (0) target = $region9
  $region8: #{cnn_forward.1} parent=0 // pred_region
    _
  $region9: #{cnn_forward.1} parent=0 // pred_fallthru
    _
  // Predicated region
  $region10: #{cnn_forward.1} parent=0 // pred_check
    _
  $region11: #{cnn_forward.1} parent=0 // pred_check_branch
    %15 = sbr.rel (0) target = $region13
  $region12: #{cnn_forward.1} parent=0 // pred_region
    _
  $region13: #{cnn_forward.1} parent=0 // pred_fallthru
    _

</llo_original>
